<compile_context>
chip_gen: v7x
topology: tpu7x:2x2x1
jax: 0.10.0
libtpu: 0.0.40
codegen_flags: <defaults>
</compile_context>

<pallas_src>
import functools

import jax
import jax.numpy as jnp
from jax.experimental import pallas as pl
from jax.experimental.pallas import tpu as pltpu

EMBEDDING_SIZE = 300
LAYER1_UNITS = 100
ACT_CLASS_NUM = 7

MAX_TB = 8     # batch tile (sublane granularity)
MAX_TS = 256   # sequence tile (lane-dense, multiple of 128 when tiling S)


def _round_up(x, m):
    return ((x + m - 1) // m) * m


def _dan_emotion_kernel(S, S_pad, TB, TS, V, E,
                        ids_ref,      # VMEM (TB, TS) int32   per-tile token ids
                        table_ref,    # VMEM (V, E)  f32      resident embedding table
                        wf_ref,       # VMEM (E, 7)  f32      folded Linear weight
                        bf_ref,       # VMEM (1, 7)  f32      folded Linear bias
                        out_ref,      # VMEM (TB, 7) f32
                        rewards_ref,  # VMEM (TB, TS) f32
                        dense_acc):   # VMEM (TB, E) f32      accumulator scratch
    si = pl.program_id(1)
    num_s = pl.num_programs(1)

    # First S tile of each batch tile: reset the dense accumulator.
    @pl.when(si == 0)
    def _():
        dense_acc[...] = jnp.zeros_like(dense_acc)

    # ---- Embedding gather as a one-hot MXU matmul (table resident in VMEM).
    # No per-row DMAs, no scalar loops: build one_hot with a vectorized compare
    # against an iota over the vocab axis and contract it with the table.
    ids = ids_ref[...]                                              # (TB, TS) int32
    vocab = jax.lax.broadcasted_iota(jnp.int32, (TB, TS, V), 2)
    one_hot = (ids[:, :, None] == vocab).astype(jnp.float32)        # (TB, TS, V)
    # TS is a multiple of 8 (enforced by the wrapper) so these reshapes are
    # tile-aligned leading-dim merges/splits (no relayout copies).
    embed = jnp.dot(one_hot.reshape(TB * TS, V), table_ref[...],
                    preferred_element_type=jnp.float32)             # (TB*TS, E)
    embed = embed.reshape(TB, TS, E)                                # (TB, TS, E)

    # sigmoid(x) == 0.5*(1 + tanh(x/2)) -> one EUP push per element.
    att = 0.5 * (jnp.tanh(0.5 * embed) + 1.0)

    # rewards = mean over embedding dim.  Padded S positions / padded B rows
    # are written but sliced off by the wrapper.
    rewards_ref[...] = jnp.sum(att, axis=-1) * (1.0 / float(E))

    weighted = embed * att                                          # (TB, TS, E)
    if S_pad != S:
        # Mask sequence padding so it does not pollute the mean over S.
        s_pos = si * TS + jax.lax.broadcasted_iota(jnp.int32, (TB, TS), 1)
        weighted = jnp.where((s_pos < S)[:, :, None], weighted, 0.0)
    dense_acc[...] += jnp.sum(weighted, axis=1)                     # (TB, E)

    # Last S tile: folded Linear(300 -> 7) + softmax.
    @pl.when(si == num_s - 1)
    def _():
        dense = dense_acc[...] * (1.0 / float(S))                   # mean over S
        h = jnp.dot(dense, wf_ref[...],
                    preferred_element_type=jnp.float32) + bf_ref[...]   # (TB, 7)
        m = jnp.max(h, axis=-1, keepdims=True)
        e = jnp.exp(h - m)
        out_ref[...] = e / jnp.sum(e, axis=-1, keepdims=True)


def fold_linear_params(w1, b1, w2, b2):
    """Fold Linear(300,100) -> Dropout -> Linear(100,7) -> Dropout (dropout is
    identity at inference) into a single affine map, hoisted out of the
    per-call path."""
    w1 = jnp.asarray(w1, jnp.float32)
    b1 = jnp.asarray(b1, jnp.float32)
    w2 = jnp.asarray(w2, jnp.float32)
    b2 = jnp.asarray(b2, jnp.float32)
    wf = w1.T @ w2.T                                     # (E, 7)
    bf = (b1 @ w2.T + b2).reshape(1, ACT_CLASS_NUM)      # (1, 7)
    return wf, bf


def dan_emotion_forward(x_batch, embeddings, wf, bf,
                        *, vmem_limit_bytes=48 * 1024 * 1024):
    """x_batch: (B, S) int token ids.  embeddings: (V, E) f32 table.
    wf/bf: folded Linear params from fold_linear_params().
    Returns (out (B, 7), rewards (B, S))."""
    B, S = x_batch.shape
    V, E = embeddings.shape

    # Tile sizes.  tb: full B (<=8) or 8.  ts: full S rounded up to a multiple
    # of 8 (so in-kernel reshapes stay tile-aligned), capped at MAX_TS (a
    # multiple of 128 -> lane-dense rewards blocks when S is tiled).
    tb = B if B <= MAX_TB else MAX_TB
    ts = _round_up(S, 8) if S <= MAX_TS else MAX_TS
    b_pad = pl.cdiv(B, tb) * tb
    s_pad = pl.cdiv(S, ts) * ts

    ids = x_batch.astype(jnp.int32)
    if (b_pad, s_pad) != (B, S):
        # Pad with token 0 (a valid row); padded S positions are masked in the
        # kernel, padded B rows / rewards columns are sliced off below.
        ids = jnp.pad(ids, ((0, b_pad - B), (0, s_pad - S)))

    table = jnp.asarray(embeddings, jnp.float32)
    wf = jnp.asarray(wf, jnp.float32)
    bf = jnp.asarray(bf, jnp.float32).reshape(1, ACT_CLASS_NUM)

    grid = (b_pad // tb, s_pad // ts)
    kernel = functools.partial(_dan_emotion_kernel, S, s_pad, tb, ts, V, E)

    out_pad, rewards_pad = pl.pallas_call(
        kernel,
        out_shape=(
            jax.ShapeDtypeStruct((b_pad, ACT_CLASS_NUM), jnp.float32),
            jax.ShapeDtypeStruct((b_pad, s_pad), jnp.float32),
        ),
        grid_spec=pltpu.PrefetchScalarGridSpec(
            num_scalar_prefetch=0,
            grid=grid,
            in_specs=[
                pl.BlockSpec((tb, ts), lambda bi, si: (bi, si)),            # ids
                pl.BlockSpec((V, E), lambda bi, si: (0, 0)),                # table (resident)
                pl.BlockSpec((E, ACT_CLASS_NUM), lambda bi, si: (0, 0)),    # folded W
                pl.BlockSpec((1, ACT_CLASS_NUM), lambda bi, si: (0, 0)),    # folded b
            ],
            out_specs=[
                pl.BlockSpec((tb, ACT_CLASS_NUM), lambda bi, si: (bi, 0)),  # out
                pl.BlockSpec((tb, ts), lambda bi, si: (bi, si)),            # rewards
            ],
            scratch_shapes=[
                pltpu.VMEM((tb, E), jnp.float32),                           # dense accumulator
            ],
        ),
        compiler_params=pltpu.CompilerParams(
            dimension_semantics=("parallel", "arbitrary"),
            vmem_limit_bytes=vmem_limit_bytes,
        ),
    )(ids, table, wf, bf)

    return out_pad[:B], rewards_pad[:B, :S]


def _reference(x_batch, embeddings, w1, b1, w2, b2):
    embed = jnp.take(embeddings, x_batch, axis=0).astype(jnp.float32)
    att = jax.nn.sigmoid(embed)
    rewards = jnp.mean(att, axis=-1)
    dense = jnp.mean(embed * att, axis=1)
    h1 = dense @ w1.T + b1
    h2 = h1 @ w2.T + b2
    out = jax.nn.softmax(h2, axis=1)
    return out, rewards


def _check(x, embeddings, w1, b1, w2, b2, wf, bf):
    B, S = x.shape
    out, rewards = dan_emotion_forward(x, embeddings, wf, bf)
    out = jax.block_until_ready(out)
    rewards = jax.block_until_ready(rewards)
    ref_out, ref_rewards = _reference(x, embeddings, w1, b1, w2, b2)
    assert out.shape == (B, ACT_CLASS_NUM)
    assert rewards.shape == (B, S)
    # Tolerances account for default MXU precision on the one-hot gather /
    # folded-Linear matmuls (bf16-pass rounding of f32 operands).
    assert jnp.allclose(out, ref_out, atol=2e-3, rtol=2e-3)
    assert jnp.allclose(rewards, ref_rewards, atol=1e-4, rtol=1e-4)


if __name__ == "__main__":
    key = jax.random.PRNGKey(0)
    k_emb, k_x1, k_x2, k_x3, k_w1, k_b1, k_w2, k_b2 = jax.random.split(key, 8)

    V = 50
    E = EMBEDDING_SIZE

    # Deterministic synthetic parameters (shapes follow the module __init__).
    embeddings = jax.random.normal(k_emb, (V, E), jnp.float32) * 0.1
    w1 = jax.random.normal(k_w1, (LAYER1_UNITS, E), jnp.float32) * 0.05
    b1 = jax.random.normal(k_b1, (LAYER1_UNITS,), jnp.float32) * 0.05
    w2 = jax.random.normal(k_w2, (ACT_CLASS_NUM, LAYER1_UNITS), jnp.float32) * 0.05
    b2 = jax.random.normal(k_b2, (ACT_CLASS_NUM,), jnp.float32) * 0.05

    # Fold the MLP once (hoisted out of the forward path).
    wf, bf = fold_linear_params(w1, b1, w2, b2)

    # Case 1: spec-like small shapes (single tile per grid axis).
    x1 = jax.random.randint(k_x1, (2, 8), 0, V, jnp.int32)
    _check(x1, embeddings, w1, b1, w2, b2, wf, bf)

    # Case 2: exercises B tiling / padded batch rows (b_pad=16, tb=8).
    x2 = jax.random.randint(k_x2, (10, 200), 0, V, jnp.int32)
    _check(x2, embeddings, w1, b1, w2, b2, wf, bf)

    # Case 3: exercises S tiling, the dense accumulator and the padding mask.
    x3 = jax.random.randint(k_x3, (3, 300), 0, V, jnp.int32)
    _check(x3, embeddings, w1, b1, w2, b2, wf, bf)

    print("KERNEL_OK")
</pallas_src>

<mosaic_0001>
module attributes {stable_mosaic.version = 11 : i64} {
  func.func @_dan_emotion_kernel(%arg0: i32, %arg1: i32, %arg2: memref<2x8xi32, #tpu.memory_space<vmem>>, %arg3: memref<50x300xf32, #tpu.memory_space<vmem>>, %arg4: memref<300x7xf32, #tpu.memory_space<vmem>>, %arg5: memref<1x7xf32, #tpu.memory_space<vmem>>, %arg6: memref<2x7xf32, #tpu.memory_space<vmem>>, %arg7: memref<2x8xf32, #tpu.memory_space<vmem>>, %arg8: memref<2x300xf32, #tpu.memory_space<vmem>>) attributes {dimension_semantics = [#tpu.dimension_semantics<parallel>, #tpu.dimension_semantics<arbitrary>], iteration_bounds = array<i64: 1, 1>, scalar_prefetch = 0 : i64, scratch_operands = 1 : i64, tpu.core_type = #tpu.core_type<tc>, window_params = [{transform_indices = @transform_0, window_bounds = array<i64: 2, 8>}, {pipeline_mode = #tpu.pipeline_mode<synchronous>, transform_indices = @transform_1, window_bounds = array<i64: 50, 300>}, {pipeline_mode = #tpu.pipeline_mode<synchronous>, transform_indices = @transform_2, window_bounds = array<i64: 300, 7>}, {pipeline_mode = #tpu.pipeline_mode<synchronous>, transform_indices = @transform_3, window_bounds = array<i64: 1, 7>}, {transform_indices = @transform_4, window_bounds = array<i64: 2, 7>}, {transform_indices = @transform_5, window_bounds = array<i64: 2, 8>}]} {
    %c0_i32 = arith.constant 0 : i32
    %0 = arith.cmpi eq, %arg1, %c0_i32 : i32
    %1 = arith.extui %0 : i1 to i32
    %c0_i32_0 = arith.constant 0 : i32
    %2 = arith.cmpi ne, %1, %c0_i32_0 : i32
    scf.if %2 {
      %cst_18 = arith.constant 0.000000e+00 : f32
      %33 = vector.broadcast %cst_18 : f32 to vector<2x300xf32>
      %c0_19 = arith.constant 0 : index
      %c0_20 = arith.constant 0 : index
      %34 = vector.load %arg8[%c0_19, %c0_20] : memref<2x300xf32, #tpu.memory_space<vmem>>, vector<2x300xf32>
      tpu.vector_store %arg8[%c0_19, %c0_20], %33 {strides = array<i32>} : memref<2x300xf32, #tpu.memory_space<vmem>>, vector<2x300xf32>,
    } else {
    }
    %c0 = arith.constant 0 : index
    %c0_1 = arith.constant 0 : index
    %3 = vector.load %arg2[%c0, %c0_1] : memref<2x8xi32, #tpu.memory_space<vmem>>, vector<2x8xi32>
    %4 = tpu.iota {dimensions = array<i32: 2>} : vector<2x8x50xi32>
    %5 = vector.shape_cast %3 : vector<2x8xi32> to vector<2x8x1xi32>
    %6 = vector.broadcast %5 : vector<2x8x1xi32> to vector<2x8x50xi32>
    %7 = arith.cmpi eq, %6, %4 : vector<2x8x50xi32>
    %8 = arith.extui %7 : vector<2x8x50xi1> to vector<2x8x50xi32>
    %9 = arith.sitofp %8 : vector<2x8x50xi32> to vector<2x8x50xf32>
    %10 = vector.shape_cast %9 : vector<2x8x50xf32> to vector<16x50xf32>
    %c0_2 = arith.constant 0 : index
    %c0_3 = arith.constant 0 : index
    %11 = vector.load %arg3[%c0_2, %c0_3] : memref<50x300xf32, #tpu.memory_space<vmem>>, vector<50x300xf32>
    %cst = arith.constant dense<0.000000e+00> : vector<16x300xf32>
    %12 = tpu.matmul %10, %11, %cst {dimension_numbers = #tpu.dot_dimension_numbers<[1], [0], [0], [1], [0, 0, 1, 1], [], []>} : vector<16x50xf32>, vector<50x300xf32>, vector<16x300xf32> -> vector<16x300xf32>
    %13 = vector.shape_cast %12 : vector<16x300xf32> to vector<2x8x300xf32>
    %cst_4 = arith.constant 5.000000e-01 : f32
    %14 = vector.broadcast %cst_4 : f32 to vector<2x8x300xf32>
    %15 = arith.mulf %14, %13 : vector<2x8x300xf32>
    %16 = math.tanh %15 : vector<2x8x300xf32>
    %cst_5 = arith.constant 1.000000e+00 : f32
    %17 = vector.broadcast %cst_5 : f32 to vector<2x8x300xf32>
    %18 = arith.addf %16, %17 : vector<2x8x300xf32>
    %cst_6 = arith.constant 5.000000e-01 : f32
    %19 = vector.broadcast %cst_6 : f32 to vector<2x8x300xf32>
    %20 = arith.mulf %19, %18 : vector<2x8x300xf32>
    %cst_7 = arith.constant dense<0.000000e+00> : vector<2x8xf32>
    %21 = vector.multi_reduction <add>, %20, %cst_7 [2] : vector<2x8x300xf32> to vector<2x8xf32>
    %cst_8 = arith.constant 0.00333333341 : f32
    %22 = vector.broadcast %cst_8 : f32 to vector<2x8xf32>
    %23 = arith.mulf %21, %22 : vector<2x8xf32>
    %c0_9 = arith.constant 0 : index
    %c0_10 = arith.constant 0 : index
    %24 = vector.load %arg7[%c0_9, %c0_10] : memref<2x8xf32, #tpu.memory_space<vmem>>, vector<2x8xf32>
    tpu.vector_store %arg7[%c0_9, %c0_10], %23 {strides = array<i32>} : memref<2x8xf32, #tpu.memory_space<vmem>>, vector<2x8xf32>,
    %25 = arith.mulf %13, %20 : vector<2x8x300xf32>
    %c0_11 = arith.constant 0 : index
    %c0_12 = arith.constant 0 : index
    %26 = vector.load %arg8[%c0_11, %c0_12] : memref<2x300xf32, #tpu.memory_space<vmem>>, vector<2x300xf32>
    %cst_13 = arith.constant dense<0.000000e+00> : vector<2x300xf32>
    %27 = vector.multi_reduction <add>, %25, %cst_13 [1] : vector<2x8x300xf32> to vector<2x300xf32>
    %28 = arith.addf %26, %27 : vector<2x300xf32>
    %c0_14 = arith.constant 0 : index
    %c0_15 = arith.constant 0 : index
    %29 = vector.load %arg8[%c0_14, %c0_15] : memref<2x300xf32, #tpu.memory_space<vmem>>, vector<2x300xf32>
    tpu.vector_store %arg8[%c0_14, %c0_15], %28 {strides = array<i32>} : memref<2x300xf32, #tpu.memory_space<vmem>>, vector<2x300xf32>,
    %c0_i32_16 = arith.constant 0 : i32
    %30 = arith.cmpi eq, %arg1, %c0_i32_16 : i32
    %31 = arith.extui %30 : i1 to i32
    %c0_i32_17 = arith.constant 0 : i32
    %32 = arith.cmpi ne, %31, %c0_i32_17 : i32
    scf.if %32 {
      %c0_18 = arith.constant 0 : index
      %c0_19 = arith.constant 0 : index
      %33 = vector.load %arg8[%c0_18, %c0_19] : memref<2x300xf32, #tpu.memory_space<vmem>>, vector<2x300xf32>
      %cst_20 = arith.constant 1.250000e-01 : f32
      %34 = vector.broadcast %cst_20 : f32 to vector<2x300xf32>
      %35 = arith.mulf %33, %34 : vector<2x300xf32>
      %c0_21 = arith.constant 0 : index
      %c0_22 = arith.constant 0 : index
      %36 = vector.load %arg4[%c0_21, %c0_22] : memref<300x7xf32, #tpu.memory_space<vmem>>, vector<300x7xf32>
      %cst_23 = arith.constant dense<0.000000e+00> : vector<2x7xf32>
      %37 = tpu.matmul %35, %36, %cst_23 {dimension_numbers = #tpu.dot_dimension_numbers<[1], [0], [0], [1], [0, 0, 1, 1], [], []>} : vector<2x300xf32>, vector<300x7xf32>, vector<2x7xf32> -> vector<2x7xf32>
      %c0_24 = arith.constant 0 : index
      %c0_25 = arith.constant 0 : index
      %38 = vector.load %arg5[%c0_24, %c0_25] : memref<1x7xf32, #tpu.memory_space<vmem>>, vector<1x7xf32>
      %39 = vector.broadcast %38 : vector<1x7xf32> to vector<2x7xf32>
      %40 = arith.addf %37, %39 : vector<2x7xf32>
      %cst_26 = arith.constant dense<0xFF800000> : vector<2xf32>
      %41 = vector.multi_reduction <maximumf>, %40, %cst_26 [1] : vector<2x7xf32> to vector<2xf32>
      %42 = vector.shape_cast %41 : vector<2xf32> to vector<2x1xf32>
      %43 = vector.broadcast %42 : vector<2x1xf32> to vector<2x7xf32>
      %44 = arith.subf %40, %43 : vector<2x7xf32>
      %45 = math.exp %44 : vector<2x7xf32>
      %cst_27 = arith.constant dense<0.000000e+00> : vector<2xf32>
      %46 = vector.multi_reduction <add>, %45, %cst_27 [1] : vector<2x7xf32> to vector<2xf32>
      %47 = vector.shape_cast %46 : vector<2xf32> to vector<2x1xf32>
      %48 = vector.broadcast %47 : vector<2x1xf32> to vector<2x7xf32>
      %49 = arith.divf %45, %48 : vector<2x7xf32>
      %c0_28 = arith.constant 0 : index
      %c0_29 = arith.constant 0 : index
      %50 = vector.load %arg6[%c0_28, %c0_29] : memref<2x7xf32, #tpu.memory_space<vmem>>, vector<2x7xf32>
      tpu.vector_store %arg6[%c0_28, %c0_29], %49 {strides = array<i32>} : memref<2x7xf32, #tpu.memory_space<vmem>>, vector<2x7xf32>,
    } else {
    }
    return
  }
  func.func @transform_0(%arg0: i32, %arg1: i32) -> (i32, i32) {
    %c0_i32 = arith.constant 0 : i32
    return %arg0, %arg1 : i32, i32
  }
  func.func @transform_1(%arg0: i32, %arg1: i32) -> (i32, i32) {
    %c0_i32 = arith.constant 0 : i32
    %c0_i32_0 = arith.constant 0 : i32
    %c0_i32_1 = arith.constant 0 : i32
    return %c0_i32, %c0_i32_0 : i32, i32
  }
  func.func @transform_2(%arg0: i32, %arg1: i32) -> (i32, i32) {
    %c0_i32 = arith.constant 0 : i32
    %c0_i32_0 = arith.constant 0 : i32
    %c0_i32_1 = arith.constant 0 : i32
    return %c0_i32, %c0_i32_0 : i32, i32
  }
  func.func @transform_3(%arg0: i32, %arg1: i32) -> (i32, i32) {
    %c0_i32 = arith.constant 0 : i32
    %c0_i32_0 = arith.constant 0 : i32
    %c0_i32_1 = arith.constant 0 : i32
    return %c0_i32, %c0_i32_0 : i32, i32
  }
  func.func @transform_4(%arg0: i32, %arg1: i32) -> (i32, i32) {
    %c0_i32 = arith.constant 0 : i32
    %c0_i32_0 = arith.constant 0 : i32
    return %arg0, %c0_i32 : i32, i32
  }
  func.func @transform_5(%arg0: i32, %arg1: i32) -> (i32, i32) {
    %c0_i32 = arith.constant 0 : i32
    return %arg0, %arg1 : i32, i32
  }
}

</mosaic_0001>

<llo_original>
// kernel: tpu_custom_call.1
$region0: #{tpu_custom_call.1}
  #allocation0 [shape = 'u32[]', space=smem, size = 0x4, offset = 0x4, fixed_abs, tag = 'smem constant byte address 0x4 - core index']
  #allocation1 [shape = 'u32[144,128]{1,0:T(1,128)}', space=vmem, size = 0x12000, scoped, tag = 'internal scratch']
  #allocation2 [shape = 'f32[2,300]{1,0:T(2,128)}', space=vmem, size = 0xc00, scoped, tag = 'scratch operand']
  %s0 = inlined_call_operand.vmem [shape: s32[2,8], index: 0, kind: input, shape index: {}]
  %s1 = inlined_call_operand.vmem [shape: f32[50,300], index: 1, kind: input, shape index: {}]
  %s2 = inlined_call_operand.vmem [shape: f32[300,7], index: 2, kind: input, shape index: {}]
  %s3 = inlined_call_operand.vmem [shape: f32[1,7], index: 3, kind: input, shape index: {}]
  %s4 = inlined_call_operand.hbm [shape: f32[2,7], index: 4, kind: output, shape index: {0}]
  %s5 = inlined_call_operand.hbm [shape: f32[2,8], index: 5, kind: output, shape index: {1}]
  %6 = xla_tuple %s4, %s5
  %s7 = sld [smem:[#allocation0]]
  $region42: #{tpu_custom_call.1} parent=0
    _
  %s9 = ssub.s32 1, %s7
  %s10 = scalar_select 0, %s9, %s7
  $region1: #{tpu_custom_call.1} parent=0
    #allocation3 [shape = 'u8[1024]{0}', space=vmem, size = 0x400, scoped, tag = 'output window, operand 0, single buffered']
    #allocation4 [shape = 's32[1]{0}', space=sflag, size = 0x4, scoped, tag = 'scoped memory for tpu_custom_call.1']
    #allocation5 [shape = 'u8[1024]{0}', space=vmem, size = 0x400, scoped, tag = 'output window, operand 1, single buffered']
    #allocation6 [shape = 's32[1]{0}', space=sflag, size = 0x4, scoped, tag = 'scoped memory for tpu_custom_call.1']
    %11 = vsyncpa [#allocation4], 0
    %12 = vsyncpa [#allocation6], 0
    // Predicated region
    $region2: #{tpu_custom_call.1} parent=1 // pred_check
      _
    $region3: #{tpu_custom_call.1} parent=1 // pred_check_branch
      %14 = sbr.rel (0) target = $region5
    $region4: #{tpu_custom_call.1} parent=1 // pred_region
      _
    $region5: #{tpu_custom_call.1} parent=1 // pred_fallthru
      _
    // Predicated region
    $region6: #{tpu_custom_call.1} parent=1 // pred_check
      _
    $region7: #{tpu_custom_call.1} parent=1 // pred_check_branch
      %16 = sbr.rel (0) target = $region9
    $region8: #{tpu_custom_call.1} parent=1 // pred_region
      _
    $region9: #{tpu_custom_call.1} parent=1 // pred_fallthru
      _
    // Predicated region
    $region10: #{tpu_custom_call.1} parent=1 // pred_check
      _
    $region11: #{tpu_custom_call.1} parent=1 // pred_check_branch
      %18 = sbr.rel (0) target = $region13
    $region12: #{tpu_custom_call.1} parent=1 // pred_region
      _
    $region13: #{tpu_custom_call.1} parent=1 // pred_fallthru
      _
    // Predicated region
    $region14: #{tpu_custom_call.1} parent=1 // pred_check
      _
    $region15: #{tpu_custom_call.1} parent=1 // pred_check_branch
      %20 = sbr.rel (0) target = $region17
    $region16: #{tpu_custom_call.1} parent=1 // pred_region
      _
    $region17: #{tpu_custom_call.1} parent=1 // pred_fallthru
      _
    %p21 = scmp.eq.s32.totalorder 0, 0
    // Predicated region
    $region18: #{tpu_custom_call.1} parent=1 // pred_check
      %p22 = pneg %p21
    $region19: #{tpu_custom_call.1} parent=1 // pred_check_branch
      %24 = sbr.rel (%p22) target = $region21
    $region20: #{tpu_custom_call.1} parent=1 // pred_region
      %vm25 = vcmask 1041408
      %vm26 = vcmask 1043458
      %vm27 = vmor %vm26, %vm25
      %vm28 = vcmask 357380
      %vm29 = vmor %vm28, %vm27
      %30 = vst.msk [vmem:[#allocation2] sm:$0x3f] %vm29, 0.0
    $region21: #{tpu_custom_call.1} parent=1 // pred_fallthru
      _
    %v31 = vld [vmem:[%s0] sm:$0x3]
    %v32 = vlaneseq
    %v33 = vand.u32 %v32, 127
    %v34 = vlaneseq
    %v35 = vshrl.u32 %v34, 7
    %v36 = vsub.s32 0, %v35
    %v37 = vrot.slane %v31, %v36
    %39 = vbcast.lane.b32.xlu0 %v37, 256
    %v40 = vpop.permute.xlu0 %39
    %v41 = vlaneseq
    %v42 = vshrl.u32 %v41, 7
    %v43 = vsub.s32 1, %v42
    %v44 = vrot.slane %v31, %v43
    %46 = vbcast.lane.b32.xlu0 %v44, 256
    %v47 = vpop.permute.xlu0 %46
    %vm48 = vcmp.eq.s32.totalorder %v40, %v33
    %vm49 = vcmp.eq.s32.totalorder %v47, %v33
    %v50 = vsel %vm48, 1, 0
    %v51 = vsel %vm49, 1, 0
    %v52 = vcvt.s32.f32 %v50
    %v53 = vcvt.s32.f32 %v51
    %v54 = vld [vmem:[%s1] sm:$0xff]
    %v55 = vld [vmem:[%s1 + $0x8] sm:$0xff]
    %v56 = vld [vmem:[%s1 + $0x10] sm:$0xff]
    %v57 = vld [vmem:[%s1 + $0x18] sm:$0xff]
    %v58 = vld [vmem:[%s1 + $0x20] sm:$0xff]
    %v59 = vld [vmem:[%s1 + $0x28] sm:$0xff]
    %v60 = vld [vmem:[%s1 + $0x30] sm:$0xff]
    %v61 = vld [vmem:[%s1 + $0x38] sm:$0xff]
    %v62 = vld [vmem:[%s1 + $0x40] sm:$0xff]
    %v63 = vld [vmem:[%s1 + $0x48] sm:$0xff]
    %v64 = vld [vmem:[%s1 + $0x50] sm:$0xff]
    %v65 = vld [vmem:[%s1 + $0x58] sm:$0xff]
    %v66 = vld [vmem:[%s1 + $0x60] sm:$0xff]
    %v67 = vld [vmem:[%s1 + $0x68] sm:$0xff]
    %v68 = vld [vmem:[%s1 + $0x70] sm:$0xff]
    %v69 = vld [vmem:[%s1 + $0x78] sm:$0xff]
    %v70 = vld [vmem:[%s1 + $0x80] sm:$0xff]
    %v71 = vld [vmem:[%s1 + $0x88] sm:$0xff]
    %v72 = vld [vmem:[%s1 + $0x90] sm:$0x3]
    %v73 = vld [vmem:[%s1 + $0x98] sm:$0x3]
    %v74 = vld [vmem:[%s1 + $0xa0] sm:$0x3]
    %vm75 = vcmask 408576
    %v77 = vsel %vm75, %v52, 0
    %v80 = vsel %vm75, %v53, 0
    %vm82 = vcmask 1041408
    %v84 = vsel %vm82, %v72, 0
    %v87 = vsel %vm82, %v73, 0
    %v90 = vsel %vm82, %v74, 0
    %92 = vmatprep.subr.mxu0 %v55
    %93 = vmatpush1.msra.mxu0 %v54
    %94 = vmatprep.subr.mxu0 %v58
    %95 = vmatpush1.msra.mxu0 %v57
    %96 = vmatprep.subr.mxu0 %v61
    %97 = vmatpush1.msra.mxu0 %v60
    %98 = vmatprep.subr.mxu0 %v64
    %99 = vmatpush1.msra.mxu0 %v63
    %100 = vmatprep.subr.mxu0 %v67
    %101 = vmatpush1.msra.mxu0 %v66
    %102 = vmatprep.subr.mxu0 %v70
    %103 = vmatpush1.msra.mxu0 %v69
    %104 = vmatprep.subr.mxu0 %v87
    %105 = vmatpush1.msra.mxu0 %v84
    %106 = vmatprep.subr.mxu0 0.0
    %107 = vmatpush1.msra.mxu0 0.0
    %108 = vmatprep.subr.mxu0 0.0
    %109 = vmatpush1.msra.mxu0 0.0
    %110 = vmatprep.subr.mxu0 0.0
    %111 = vmatpush1.msra.mxu0 0.0
    %112 = vmatprep.subr.mxu0 0.0
    %113 = vmatpush1.msra.mxu0 0.0
    %114 = vmatprep.subr.mxu0 0.0
    %115 = vmatpush1.msra.mxu0 0.0
    %116 = vmatprep.subr.mxu0 0.0
    %117 = vmatpush1.msra.mxu0 0.0
    %118 = vmatprep.subr.mxu0 0.0
    %119 = vmatpush1.msra.mxu0 0.0
    %120 = vmatprep.subr.mxu0 0.0
    %121 = vmatpush1.msra.mxu0 0.0
    %122 = vmatprep.subr.mxu0 0.0
    %123 = vmatpush1.msra.mxu0 0.0
    %124 = vmatprep.subr.mxu0 0.0
    %125 = vmatpush1.msra.mxu0 0.0
    %126 = vmatprep.subr.mxu0 0.0
    %127 = vmatpush1.msra.mxu0 0.0
    %128 = vmatprep.subr.mxu0 0.0
    %129 = vmatpush1.msra.mxu0 0.0
    %130 = vmatprep.subr.mxu0 0.0
    %131 = vmatpush1.msra.mxu0 0.0
    %132 = vmatprep.subr.mxu0 0.0
    %133 = vmatpush1.msra.mxu0 0.0
    %134 = vmatprep.subr.mxu0 0.0
    %135 = vmatpush1.msra.mxu0 0.0
    %136 = vmatprep.subr.mxu0 0.0
    %137 = vmatpush1.msra.mxu0 0.0
    %138 = vmatprep.subr.mxu0 0.0
    %139 = vmatpush1.msra.mxu0 0.0
    %140 = vmatprep.subr.mxu0 0.0
    %141 = vmatpush1.msra.mxu0 0.0
    %142 = vmatprep.subr.mxu0 0.0
    %143 = vmatpush1.msra.mxu0 0.0
    %144 = vmatprep.subr.mxu0 0.0
    %145 = vmatpush1.msra.mxu0 0.0
    %146 = vmatprep.subr.mxu0 0.0
    %147 = vmatpush1.msra.mxu0 0.0
    %148 = vmatprep.subr.mxu0 0.0
    %149 = vmatpush1.msra.mxu0 0.0
    %150 = vmatprep.subr.mxu0 0.0
    %151 = vmatpush1.msra.mxu0 0.0
    %152 = vmatprep.subr.mxu0 0.0
    %153 = vmatpush1.msra.mxu0 0.0
    %154 = vmatprep.subr.mxu0 0.0
    %155 = vmatpush1.msra.mxu0 0.0
    %156 = vmatprep.mubr.f32.mxu0 0.0
    %157 = vmatmul.mubr.f32.gmra.mrb[0].mxu0 %v77
    %v158 = vpop.f32.mrb[0].mxu0
    %v159 = vadd.f32 0.0, %v158
    %v160 = vpop.f32.mrb[0].mxu0
    %v161 = vadd.f32 0.0, %v160
    %162 = vmatprep.mubr.f32.mxu0 0.0
    %163 = vmatmul.mubr.f32.gmra.mrb[0].mxu0 %v80
    %v164 = vpop.f32.mrb[0].mxu0
    %v165 = vadd.f32 0.0, %v164
    %v166 = vpop.f32.mrb[0].mxu0
    %v167 = vadd.f32 0.0, %v166
    %168 = vdwg.mxu0
    %169 = vmatprep.subr.mxu0 0.0
    %170 = vmatpush1.msra.mxu0 %v56
    %171 = vmatprep.subr.mxu0 0.0
    %172 = vmatpush1.msra.mxu0 %v59
    %173 = vmatprep.subr.mxu0 0.0
    %174 = vmatpush1.msra.mxu0 %v62
    %175 = vmatprep.subr.mxu0 0.0
    %176 = vmatpush1.msra.mxu0 %v65
    %177 = vmatprep.subr.mxu0 0.0
    %178 = vmatpush1.msra.mxu0 %v68
    %179 = vmatprep.subr.mxu0 0.0
    %180 = vmatpush1.msra.mxu0 %v71
    %181 = vmatprep.subr.mxu0 0.0
    %182 = vmatpush1.msra.mxu0 %v90
    %183 = vmatprep.subr.mxu0 0.0
    %184 = vmatpush1.msra.mxu0 0.0
    %185 = vmatprep.subr.mxu0 0.0
    %186 = vmatpush1.msra.mxu0 0.0
    %187 = vmatprep.subr.mxu0 0.0
    %188 = vmatpush1.msra.mxu0 0.0
    %189 = vmatprep.subr.mxu0 0.0
    %190 = vmatpush1.msra.mxu0 0.0
    %191 = vmatprep.subr.mxu0 0.0
    %192 = vmatpush1.msra.mxu0 0.0
    %193 = vmatprep.subr.mxu0 0.0
    %194 = vmatpush1.msra.mxu0 0.0
    %195 = vmatprep.subr.mxu0 0.0
    %196 = vmatpush1.msra.mxu0 0.0
    %197 = vmatprep.subr.mxu0 0.0
    %198 = vmatpush1.msra.mxu0 0.0
    %199 = vmatprep.subr.mxu0 0.0
    %200 = vmatpush1.msra.mxu0 0.0
    %201 = vmatprep.subr.mxu0 0.0
    %202 = vmatpush1.msra.mxu0 0.0
    %203 = vmatprep.subr.mxu0 0.0
    %204 = vmatpush1.msra.mxu0 0.0
    %205 = vmatprep.subr.mxu0 0.0
    %206 = vmatpush1.msra.mxu0 0.0
    %207 = vmatprep.subr.mxu0 0.0
    %208 = vmatpush1.msra.mxu0 0.0
    %209 = vmatprep.subr.mxu0 0.0
    %210 = vmatpush1.msra.mxu0 0.0
    %211 = vmatprep.subr.mxu0 0.0
    %212 = vmatpush1.msra.mxu0 0.0
    %213 = vmatprep.subr.mxu0 0.0
    %214 = vmatpush1.msra.mxu0 0.0
    %215 = vmatprep.subr.mxu0 0.0
    %216 = vmatpush1.msra.mxu0 0.0
    %217 = vmatprep.subr.mxu0 0.0
    %218 = vmatpush1.msra.mxu0 0.0
    %219 = vmatprep.subr.mxu0 0.0
    %220 = vmatpush1.msra.mxu0 0.0
    %221 = vmatprep.subr.mxu0 0.0
    %222 = vmatpush1.msra.mxu0 0.0
    %223 = vmatprep.subr.mxu0 0.0
    %224 = vmatpush1.msra.mxu0 0.0
    %225 = vmatprep.subr.mxu0 0.0
    %226 = vmatpush1.msra.mxu0 0.0
    %227 = vmatprep.subr.mxu0 0.0
    %228 = vmatpush1.msra.mxu0 0.0
    %229 = vmatprep.subr.mxu0 0.0
    %230 = vmatpush1.msra.mxu0 0.0
    %231 = vmatprep.subr.mxu0 0.0
    %232 = vmatpush1.msra.mxu0 0.0
    %233 = vmatprep.mubr.f32.mxu0 0.0
    %234 = vmatmul.mubr.f32.gmra.mrb[0].mxu0 %v77
    %v235 = vpop.f32.mrb[0].mxu0
    %v236 = vadd.f32 0.0, %v235
    %v237 = vpop.f32.mrb[0].mxu0
    %238 = vmatprep.mubr.f32.mxu0 0.0
    %239 = vmatmul.mubr.f32.gmra.mrb[0].mxu0 %v80
    %v240 = vpop.f32.mrb[0].mxu0
    %v241 = vadd.f32 0.0, %v240
    %v242 = vpop.f32.mrb[0].mxu0
    %243 = vdwg.mxu0
    %v244 = vmul.f32 %v159, 0.5
    %v245 = vmul.f32 %v161, 0.5
    %v246 = vmul.f32 %v236, 0.5
    %v247 = vmul.f32 %v165, 0.5
    %v248 = vmul.f32 %v167, 0.5
    %v249 = vmul.f32 %v241, 0.5
    %v250 = vtanh.pop %v244
    %v251 = vtanh.pop %v245
    %v252 = vtanh.pop %v246
    %v253 = vtanh.pop %v247
    %v254 = vtanh.pop %v248
    %v255 = vtanh.pop %v249
    %v256 = vadd.f32 %v250, 1.0
    %v257 = vadd.f32 %v251, 1.0
    %v258 = vadd.f32 %v252, 1.0
    %v259 = vadd.f32 %v253, 1.0
    %v260 = vadd.f32 %v254, 1.0
    %v261 = vadd.f32 %v255, 1.0
    %v262 = vmul.f32 %v256, 0.5
    %v263 = vmul.f32 %v257, 0.5
    %v264 = vmul.f32 %v258, 0.5
    %v265 = vmul.f32 %v259, 0.5
    %v266 = vmul.f32 %v260, 0.5
    %v267 = vmul.f32 %v261, 0.5
    %v268 = vadd.f32 %v262, %v263
    %vm269 = vcmask 359424
    %v270 = vsel %vm269, %v264, 0.0
    %v271 = vadd.f32 %v268, %v270
    %272 = vadd.xlane.f32.xlu0 %v271
    %v273 = vpop.xlane.xlu0 %272
    %v274 = vadd.f32 %v265, %v266
    %v275 = vsel %vm269, %v267, 0.0
    %v276 = vadd.f32 %v274, %v275
    %277 = vadd.xlane.f32.xlu0 %v276
    %v278 = vpop.xlane.xlu0 %277
    %v279 = vmul.f32 %v273, 0.0033333334
    %v280 = vmul.f32 %v278, 0.0033333334
    %v283 = vlaneseq
    %v284 = vshrl.u32 %v283, 7
    %v285 = vsub.s32 %v33, %v284
    %v286 = vrot.slane %v279, %v285
    %v287 = vlaneseq
    %v288 = vshrl.u32 %v287, 7
    %v289 = vsub.s32 %v33, %v288
    %v290 = vrot.slane %v280, %v289
    %vm291 = vcmask 1041409
    %v292 = vsel %vm291, %v290, %v286
    %vm294 = vcmask 58368
    %295 = vst.msk [vmem:[#allocation5] sm:$0x3] %vm294, %v292
    %v296 = vmul.f32 %v159, %v262
    %v297 = vmul.f32 %v161, %v263
    %v298 = vmul.f32 %v236, %v264
    %v299 = vmul.f32 %v165, %v265
    %v300 = vmul.f32 %v167, %v266
    %v301 = vmul.f32 %v241, %v267
    %v302 = vld [vmem:[#allocation2] sm:$0x3f]
    %v303 = vrot.slane %v296, 4
    %v304 = vadd.f32 %v296, %v303
    %v305 = vrot.slane %v304, 2
    %v306 = vadd.f32 %v304, %v305
    %v307 = vrot.slane %v306, 1
    %v308 = vadd.f32 %v306, %v307
    %v309 = vrot.slane %v297, 4
    %v310 = vadd.f32 %v297, %v309
    %v311 = vrot.slane %v310, 2
    %v312 = vadd.f32 %v310, %v311
    %v313 = vrot.slane %v312, 1
    %v314 = vadd.f32 %v312, %v313
    %v315 = vsel %vm269, %v298, 0.0
    %v316 = vrot.slane %v315, 4
    %v317 = vadd.f32 %v315, %v316
    %v318 = vrot.slane %v317, 2
    %v319 = vadd.f32 %v317, %v318
    %v320 = vrot.slane %v319, 1
    %v321 = vadd.f32 %v319, %v320
    %v322 = vrot.slane %v299, 4
    %v323 = vadd.f32 %v299, %v322
    %v324 = vrot.slane %v323, 2
    %v325 = vadd.f32 %v323, %v324
    %v326 = vrot.slane %v325, 1
    %v327 = vadd.f32 %v325, %v326
    %v328 = vrot.slane %v300, 4
    %v329 = vadd.f32 %v300, %v328
    %v330 = vrot.slane %v329, 2
    %v331 = vadd.f32 %v329, %v330
    %v332 = vrot.slane %v331, 1
    %v333 = vadd.f32 %v331, %v332
    %v334 = vsel %vm269, %v301, 0.0
    %v335 = vrot.slane %v334, 4
    %v336 = vadd.f32 %v334, %v335
    %v337 = vrot.slane %v336, 2
    %v338 = vadd.f32 %v336, %v337
    %v339 = vrot.slane %v338, 1
    %v340 = vadd.f32 %v338, %v339
    %v347 = vcombine.low %v308, %v314
    %v349 = vunpack.c.l.s4 1983009808
    %v350 = vunpack.c.0.s8 %v349
    %v351 = vlaneseq
    %v352 = vshrl.u32 %v351, 7
    %v353 = vsub.s32 %v350, %v352
    %v354 = vrot.slane %v347, %v353
    %v356 = vunpack.c.l.s4 1983009808
    %v357 = vunpack.c.0.s8 %v356
    %v358 = vlaneseq
    %v359 = vshrl.u32 %v358, 7
    %v360 = vsub.s32 %v357, %v359
    %v361 = vrot.slane %v321, %v360
    %v362 = vcombine.low %v354, %v361
    %v363 = vcombine.low %v327, %v333
    %v365 = vunpack.c.l.s4 1983009808
    %v366 = vunpack.c.0.s8 %v365
    %v367 = vlaneseq
    %v368 = vshrl.u32 %v367, 7
    %v369 = vsub.s32 %v366, %v368
    %v370 = vrot.slane %v363, %v369
    %v372 = vunpack.c.l.s4 1983009808
    %v373 = vunpack.c.0.s8 %v372
    %v374 = vlaneseq
    %v375 = vshrl.u32 %v374, 7
    %v376 = vsub.s32 %v373, %v375
    %v377 = vrot.slane %v340, %v376
    %v378 = vcombine.low %v370, %v377
    %vm379 = vcmask 1044484
    %v380 = vsel %vm379, %v362, %v362
    %vm381 = vcmask 1046534
    %v382 = vsel %vm381, %v362, %v380
    %v383 = vrot.slane %v378, 7
    %v384 = vsel %vm291, %v383, %v382
    %vm385 = vcmask 1043459
    %v386 = vsel %vm385, %v383, %v384
    %vm387 = vcmask 1045509
    %v388 = vsel %vm387, %v383, %v386
    %vm389 = vcmask 1047559
    %v390 = vsel %vm389, %v383, %v388
    %v392 = vadd.f32 %v302, %v390
    %vm393 = vcmask 1043458
    %vm394 = vmor %vm393, %vm82
    %vm395 = vcmask 357380
    %vm396 = vmor %vm395, %vm394
    %397 = vst.msk [vmem:[#allocation2] sm:$0x3f] %vm396, %v392
    // Predicated region
    $region22: #{tpu_custom_call.1} parent=1 // pred_check
      %p398 = pneg %p21
    $region23: #{tpu_custom_call.1} parent=1 // pred_check_branch
      %400 = sbr.rel (%p398) target = $region25
    $region24: #{tpu_custom_call.1} parent=1 // pred_region
      %v401 = vld [vmem:[#allocation2] sm:$0x3f]
      %v402 = vmul.f32 %v401, 0.125
      %v403 = vld [vmem:[%s2] sm:$0xff]
      %v404 = vld [vmem:[%s2 + $0x8] sm:$0xff]
      %v405 = vld [vmem:[%s2 + $0x10] sm:$0xff]
      %v406 = vld [vmem:[%s2 + $0x18] sm:$0xff]
      %v407 = vld [vmem:[%s2 + $0x20] sm:$0xff]
      %v408 = vld [vmem:[%s2 + $0x28] sm:$0xff]
      %v409 = vld [vmem:[%s2 + $0x30] sm:$0xff]
      %v410 = vld [vmem:[%s2 + $0x38] sm:$0xff]
      %v411 = vld [vmem:[%s2 + $0x40] sm:$0xff]
      %v412 = vld [vmem:[%s2 + $0x48] sm:$0xff]
      %v413 = vld [vmem:[%s2 + $0x50] sm:$0xff]
      %v414 = vld [vmem:[%s2 + $0x58] sm:$0xff]
      %v415 = vld [vmem:[%s2 + $0x60] sm:$0xff]
      %v416 = vld [vmem:[%s2 + $0x68] sm:$0xff]
      %v417 = vld [vmem:[%s2 + $0x70] sm:$0xff]
      %v418 = vld [vmem:[%s2 + $0x78] sm:$0xff]
      %v419 = vld [vmem:[%s2 + $0x80] sm:$0xff]
      %v420 = vld [vmem:[%s2 + $0x88] sm:$0xff]
      %v421 = vld [vmem:[%s2 + $0x90] sm:$0xff]
      %v422 = vld [vmem:[%s2 + $0x98] sm:$0xff]
      %v423 = vld [vmem:[%s2 + $0xa0] sm:$0xff]
      %v424 = vld [vmem:[%s2 + $0xa8] sm:$0xff]
      %v425 = vld [vmem:[%s2 + $0xb0] sm:$0xff]
      %v426 = vld [vmem:[%s2 + $0xb8] sm:$0xff]
      %v427 = vld [vmem:[%s2 + $0xc0] sm:$0xff]
      %v428 = vld [vmem:[%s2 + $0xc8] sm:$0xff]
      %v429 = vld [vmem:[%s2 + $0xd0] sm:$0xff]
      %v430 = vld [vmem:[%s2 + $0xd8] sm:$0xff]
      %v431 = vld [vmem:[%s2 + $0xe0] sm:$0xff]
      %v432 = vld [vmem:[%s2 + $0xe8] sm:$0xff]
      %v433 = vld [vmem:[%s2 + $0xf0] sm:$0xff]
      %v434 = vld [vmem:[%s2 + $0xf8] sm:$0xff]
      %v435 = vld [vmem:[%s2 + $0x100] sm:$0xff]
      %v436 = vld [vmem:[%s2 + $0x108] sm:$0xff]
      %v437 = vld [vmem:[%s2 + $0x110] sm:$0xff]
      %v438 = vld [vmem:[%s2 + $0x118] sm:$0xff]
      %v439 = vld [vmem:[%s2 + $0x120] sm:$0xff]
      %v440 = vld [vmem:[%s2 + $0x128] sm:$0xf]
      %v441 = vld [vmem:[%s3] sm:$0x1]
      %v443 = vlaneseq
      %v444 = vshrl.u32 %v443, 7
      %v445 = vsub.s32 0, %v444
      %v446 = vrot.slane %v441, %v445
      %v449 = vcombine.high %v402, %v402
      %v451 = vunpack.c.l.s4 1983009808
      %v452 = vunpack.c.0.s8 %v451
      %v453 = vlaneseq
      %v454 = vshrl.u32 %v453, 7
      %v455 = vsub.s32 %v452, %v454
      %v456 = vrot.slane %v402, %v455
      %v458 = vunpack.c.l.s4 1983009808
      %v459 = vunpack.c.0.s8 %v458
      %v460 = vlaneseq
      %v461 = vshrl.u32 %v460, 7
      %v462 = vsub.s32 %v459, %v461
      %v463 = vrot.slane %v449, %v462
      %v464 = vcombine.high %v456, %v456
      %v467 = vsel %vm269, %v463, 0
      %vm469 = vcmask 1043456
      %v471 = vsel %vm469, %v440, 0
      %473 = vmatprep.subr.mxu0 0.0
      %474 = vmatpush1.msra.mxu0 %v403
      %475 = vmatprep.subr.mxu0 0.0
      %476 = vmatpush1.msra.mxu0 %v404
      %477 = vmatprep.subr.mxu0 0.0
      %478 = vmatpush1.msra.mxu0 %v405
      %479 = vmatprep.subr.mxu0 0.0
      %480 = vmatpush1.msra.mxu0 %v406
      %481 = vmatprep.subr.mxu0 0.0
      %482 = vmatpush1.msra.mxu0 %v407
      %483 = vmatprep.subr.mxu0 0.0
      %484 = vmatpush1.msra.mxu0 %v408
      %485 = vmatprep.subr.mxu0 0.0
      %486 = vmatpush1.msra.mxu0 %v409
      %487 = vmatprep.subr.mxu0 0.0
      %488 = vmatpush1.msra.mxu0 %v410
      %489 = vmatprep.subr.mxu0 0.0
      %490 = vmatpush1.msra.mxu0 %v411
      %491 = vmatprep.subr.mxu0 0.0
      %492 = vmatpush1.msra.mxu0 %v412
      %493 = vmatprep.subr.mxu0 0.0
      %494 = vmatpush1.msra.mxu0 %v413
      %495 = vmatprep.subr.mxu0 0.0
      %496 = vmatpush1.msra.mxu0 %v414
      %497 = vmatprep.subr.mxu0 0.0
      %498 = vmatpush1.msra.mxu0 %v415
      %499 = vmatprep.subr.mxu0 0.0
      %500 = vmatpush1.msra.mxu0 %v416
      %501 = vmatprep.subr.mxu0 0.0
      %502 = vmatpush1.msra.mxu0 %v417
      %503 = vmatprep.subr.mxu0 0.0
      %504 = vmatpush1.msra.mxu0 %v418
      %505 = vmatprep.subr.mxu0 0.0
      %506 = vmatpush1.msra.mxu0 %v419
      %507 = vmatprep.subr.mxu0 0.0
      %508 = vmatpush1.msra.mxu0 %v420
      %509 = vmatprep.subr.mxu0 0.0
      %510 = vmatpush1.msra.mxu0 %v421
      %511 = vmatprep.subr.mxu0 0.0
      %512 = vmatpush1.msra.mxu0 %v422
      %513 = vmatprep.subr.mxu0 0.0
      %514 = vmatpush1.msra.mxu0 %v423
      %515 = vmatprep.subr.mxu0 0.0
      %516 = vmatpush1.msra.mxu0 %v424
      %517 = vmatprep.subr.mxu0 0.0
      %518 = vmatpush1.msra.mxu0 %v425
      %519 = vmatprep.subr.mxu0 0.0
      %520 = vmatpush1.msra.mxu0 %v426
      %521 = vmatprep.subr.mxu0 0.0
      %522 = vmatpush1.msra.mxu0 %v427
      %523 = vmatprep.subr.mxu0 0.0
      %524 = vmatpush1.msra.mxu0 %v428
      %525 = vmatprep.subr.mxu0 0.0
      %526 = vmatpush1.msra.mxu0 %v429
      %527 = vmatprep.subr.mxu0 0.0
      %528 = vmatpush1.msra.mxu0 %v430
      %529 = vmatprep.subr.mxu0 0.0
      %530 = vmatpush1.msra.mxu0 %v431
      %531 = vmatprep.subr.mxu0 0.0
      %532 = vmatpush1.msra.mxu0 %v432
      %533 = vmatprep.subr.mxu0 0.0
      %534 = vmatpush1.msra.mxu0 %v433
      %535 = vmatprep.subr.mxu0 0.0
      %536 = vmatpush1.msra.mxu0 %v434
      %537 = vmatprep.mubr.f32.mxu0 %v464
      %538 = vmatmul.mubr.f32.gmra.mrb[0].mxu0 %v456
      %v539 = vpop.f32.mrb[0].mxu0
      %v540 = vadd.f32 %v446, %v539
      %v541 = vpop.f32.mrb[0].mxu0
      %542 = vdwg.mxu0
      %543 = vmatprep.subr.mxu0 0.0
      %544 = vmatpush1.msra.mxu0 %v435
      %545 = vmatprep.subr.mxu0 0.0
      %546 = vmatpush1.msra.mxu0 %v436
      %547 = vmatprep.subr.mxu0 0.0
      %548 = vmatpush1.msra.mxu0 %v437
      %549 = vmatprep.subr.mxu0 0.0
      %550 = vmatpush1.msra.mxu0 %v438
      %551 = vmatprep.subr.mxu0 0.0
      %552 = vmatpush1.msra.mxu0 %v439
      %553 = vmatprep.subr.mxu0 0.0
      %554 = vmatpush1.msra.mxu0 %v471
      %555 = vmatprep.subr.mxu0 0.0
      %556 = vmatpush1.msra.mxu0 0.0
      %557 = vmatprep.subr.mxu0 0.0
      %558 = vmatpush1.msra.mxu0 0.0
      %559 = vmatprep.subr.mxu0 0.0
      %560 = vmatpush1.msra.mxu0 0.0
      %561 = vmatprep.subr.mxu0 0.0
      %562 = vmatpush1.msra.mxu0 0.0
      %563 = vmatprep.subr.mxu0 0.0
      %564 = vmatpush1.msra.mxu0 0.0
      %565 = vmatprep.subr.mxu0 0.0
      %566 = vmatpush1.msra.mxu0 0.0
      %567 = vmatprep.subr.mxu0 0.0
      %568 = vmatpush1.msra.mxu0 0.0
      %569 = vmatprep.subr.mxu0 0.0
      %570 = vmatpush1.msra.mxu0 0.0
      %571 = vmatprep.subr.mxu0 0.0
      %572 = vmatpush1.msra.mxu0 0.0
      %573 = vmatprep.subr.mxu0 0.0
      %574 = vmatpush1.msra.mxu0 0.0
      %575 = vmatprep.subr.mxu0 0.0
      %576 = vmatpush1.msra.mxu0 0.0
      %577 = vmatprep.subr.mxu0 0.0
      %578 = vmatpush1.msra.mxu0 0.0
      %579 = vmatprep.subr.mxu0 0.0
      %580 = vmatpush1.msra.mxu0 0.0
      %581 = vmatprep.subr.mxu0 0.0
      %582 = vmatpush1.msra.mxu0 0.0
      %583 = vmatprep.subr.mxu0 0.0
      %584 = vmatpush1.msra.mxu0 0.0
      %585 = vmatprep.subr.mxu0 0.0
      %586 = vmatpush1.msra.mxu0 0.0
      %587 = vmatprep.subr.mxu0 0.0
      %588 = vmatpush1.msra.mxu0 0.0
      %589 = vmatprep.subr.mxu0 0.0
      %590 = vmatpush1.msra.mxu0 0.0
      %591 = vmatprep.subr.mxu0 0.0
      %592 = vmatpush1.msra.mxu0 0.0
      %593 = vmatprep.subr.mxu0 0.0
      %594 = vmatpush1.msra.mxu0 0.0
      %595 = vmatprep.subr.mxu0 0.0
      %596 = vmatpush1.msra.mxu0 0.0
      %597 = vmatprep.subr.mxu0 0.0
      %598 = vmatpush1.msra.mxu0 0.0
      %599 = vmatprep.subr.mxu0 0.0
      %600 = vmatpush1.msra.mxu0 0.0
      %601 = vmatprep.subr.mxu0 0.0
      %602 = vmatpush1.msra.mxu0 0.0
      %603 = vmatprep.subr.mxu0 0.0
      %604 = vmatpush1.msra.mxu0 0.0
      %605 = vmatprep.subr.mxu0 0.0
      %606 = vmatpush1.msra.mxu0 0.0
      %607 = vmatprep.mubr.f32.mxu0 0.0
      %608 = vmatmul.mubr.f32.gmra.mrb[0].mxu0 %v467
      %v609 = vpop.f32.mrb[0].mxu0
      %v610 = vadd.f32 %v540, %v609
      %v611 = vpop.f32.mrb[0].mxu0
      %612 = vdwg.mxu0
      %vm613 = vcmask 50176
      %v614 = vsel %vm613, %v610, -inf
      %615 = vmax.xlane.f32.xlu0 %v614
      %v616 = vpop.xlane.xlu0 %615
      %v617 = vsub.f32 %v610, %v616
      %v618 = vmul.f32 %v617, 1.442695
      %v619 = vpow.pop %v618
      %v620 = vsel %vm613, %v619, 0.0
      %621 = vadd.xlane.f32.xlu0 %v620
      %v622 = vpop.xlane.xlu0 %621
      %v623 = vrcp.pop %v622
      %v624 = vmul.f32 %v619, %v623
      %625 = vst.msk [vmem:[#allocation3] sm:$0x3] %vm613, %v624
    $region25: #{tpu_custom_call.1} parent=1 // pred_fallthru
      _
    // Predicated region
    $region26: #{tpu_custom_call.1} parent=1 // pred_check
      _
    $region27: #{tpu_custom_call.1} parent=1 // pred_check_branch
      %627 = sbr.rel (0) target = $region29
    $region28: #{tpu_custom_call.1} parent=1 // pred_region
      %s629 = ssub.s32 32, 32
      %630 = vsyncadd [#allocation4], %s629
      %s632 = sshll.u32 [#allocation3], 4
      %s633 = int_to_ptr.vmem [resolvable:$true] %s632
      %635 = dma.vmem_to_hbm [thread:$0]  %s633, 32, %s4, [#allocation4]
    $region29: #{tpu_custom_call.1} parent=1 // pred_fallthru
      _
    // Predicated region
    $region30: #{tpu_custom_call.1} parent=1 // pred_check
      _
    $region31: #{tpu_custom_call.1} parent=1 // pred_check_branch
      %637 = sbr.rel (0) target = $region33
    $region32: #{tpu_custom_call.1} parent=1 // pred_region
      %s639 = ssub.s32 32, 32
      %640 = vsyncadd [#allocation6], %s639
      %s642 = sshll.u32 [#allocation5], 4
      %s643 = int_to_ptr.vmem [resolvable:$true] %s642
      %645 = dma.vmem_to_hbm [thread:$0]  %s643, 32, %s5, [#allocation6]
    $region33: #{tpu_custom_call.1} parent=1 // pred_fallthru
      _
    // Predicated region
    $region34: #{tpu_custom_call.1} parent=1 // pred_check
      _
    $region35: #{tpu_custom_call.1} parent=1 // pred_check_branch
      %647 = sbr.rel (0) target = $region37
    $region36: #{tpu_custom_call.1} parent=1 // pred_region
      %648 = dma.done [#allocation4], 32
    $region37: #{tpu_custom_call.1} parent=1 // pred_fallthru
      _
    // Predicated region
    $region38: #{tpu_custom_call.1} parent=1 // pred_check
      _
    $region39: #{tpu_custom_call.1} parent=1 // pred_check_branch
      %650 = sbr.rel (0) target = $region41
    $region40: #{tpu_custom_call.1} parent=1 // pred_region
      %651 = dma.done [#allocation6], 32
    $region41: #{tpu_custom_call.1} parent=1 // pred_fallthru
      _
    %652 = vsyncpa [#allocation4], 1
    %653 = vsyncpa [#allocation6], 1

</llo_original>
